<compile_context>
chip_gen: v7x
topology: tpu7x:2x2x1
jax: 0.10.0
libtpu: 0.0.40
codegen_flags: <defaults>
</compile_context>

<pallas_src>
import jax
import jax.numpy as jnp
from jax.experimental import pallas as pl
from jax.experimental.pallas import tpu as pltpu

LANE = 128                       # vreg lane width  (last-dim granularity)
SUBLANE = 8                      # vreg sublane width (f32 second-to-last dim)
VMEM_LIMIT_BYTES = 32 * 1024 * 1024


def _round_up(n, m):
    return ((n + m - 1) // m) * m


def _cdiv(a, b):
    return -(-a // b)


# ----------------------------------------------------------------------------
# Parameter preparation (runs ONCE at init/load time, never per forward call).
# ----------------------------------------------------------------------------
def prepare_params(w1, b1, w2, b2, *, matmul_dtype=jnp.float32):
    """Pad + lay out SimpleModel parameters for the kernel.

    w1, w2: (H, H) stored as (in, out).  b1, b2: (H,).
    matmul_dtype: dtype of the MXU operands (use jnp.bfloat16 on v6e/v7x for
    the native fast path; biases stay f32 so elementwise math is f32 on v5e).
    """
    H = w1.shape[0]
    Hp = _round_up(H, LANE)  # lane-dense hidden width
    # W1 padded on the *output* dim only -> hidden activation is lane-dense,
    # and the padded hidden columns are exactly 0 (zero weight cols, zero bias).
    w1p = jnp.zeros((H, Hp), matmul_dtype).at[:, :H].set(w1.astype(matmul_dtype))
    b1p = jnp.zeros((1, Hp), jnp.float32).at[0, :H].set(b1.astype(jnp.float32))
    # W2 padded on the *input* dim only -> second matmul consumes the zero
    # hidden columns harmlessly and produces the unpadded (., H) output.
    w2p = jnp.zeros((Hp, H), matmul_dtype).at[:H, :].set(w2.astype(matmul_dtype))
    b2p = b2.astype(jnp.float32).reshape(1, H)
    return {"w1": w1p, "b1": b1p, "w2": w2p, "b2": b2p, "H": H, "Hp": Hp}


# ----------------------------------------------------------------------------
# Kernels
# ----------------------------------------------------------------------------
def mlp_fused_kernel(x_ref, w1_ref, b1_ref, w2_ref, b2_ref, o_ref):
    # x_ref: (TM, H)  w1_ref: (H, Hp)  b1_ref: (1, Hp)
    # w2_ref: (Hp, H) b2_ref: (1, H)   o_ref: (TM, H)
    cd = w1_ref.dtype                                  # MXU operand dtype
    x = x_ref[...].astype(cd)
    # linear1 (MXU, f32 accumulation) + bias + ReLU in f32 (v5e-friendly VPU).
    h = jnp.dot(x, w1_ref[...], preferred_element_type=jnp.float32)
    h = jnp.maximum(h + b1_ref[...], 0.0)
    # linear2 (MXU, f32 accumulation) + bias, store in output dtype.
    y = jnp.dot(h.astype(cd), w2_ref[...], preferred_element_type=jnp.float32)
    o_ref[...] = (y + b2_ref[...]).astype(o_ref.dtype)


def mlp_tiled_kernel(x_ref, w1_ref, b1_ref, w2_ref, b2_ref, o_ref, acc_ref):
    # Hidden-dim tiled fallback for large H (VMEM-bounded weights):
    # out = sum_j relu(x @ W1[:, j] + b1[j]) @ W2[j, :]  + b2
    j = pl.program_id(1)

    @pl.when(j == 0)
    def _():
        acc_ref[...] = jnp.zeros_like(acc_ref)

    cd = w1_ref.dtype
    x = x_ref[...].astype(cd)
    h = jnp.dot(x, w1_ref[...], preferred_element_type=jnp.float32)
    h = jnp.maximum(h + b1_ref[...], 0.0)
    acc_ref[...] += jnp.dot(h.astype(cd), w2_ref[...],
                            preferred_element_type=jnp.float32)

    @pl.when(j == pl.num_programs(1) - 1)
    def _():
        o_ref[...] = (acc_ref[...] + b2_ref[...]).astype(o_ref.dtype)


# ----------------------------------------------------------------------------
# Wrappers
# ----------------------------------------------------------------------------
def _pick_tm(B, tm):
    tm = _round_up(max(tm, SUBLANE), SUBLANE)          # always a multiple of 8
    if B >= 2 * SUBLANE:
        # keep >= 2 grid steps so both v7x TensorCores get work
        tm = min(tm, _round_up(_cdiv(B, 2), SUBLANE))
    return min(tm, _round_up(B, SUBLANE))


def _pick_hidden_tile(Hp, th):
    th = min(_round_up(th, LANE), Hp)
    while Hp % th:                                     # must divide Hp exactly
        th -= LANE
    return th


def _vmem_budget_bytes():
    try:
        cap = int(pltpu.get_tpu_info().vmem_capacity_bytes)
    except Exception:
        cap = 64 * 1024 * 1024                         # assume smallest (v7x)
    return cap // 2                                    # leave pipeline headroom


def _nbytes(a):
    return int(a.size) * a.dtype.itemsize


def _cost_estimate(B, H, Hp, x, params):
    return pl.CostEstimate(
        flops=4 * B * H * Hp,                          # two (B,H/Hp) matmuls
        transcendentals=0,
        bytes_accessed=(_nbytes(x) + _nbytes(params["w1"]) + _nbytes(params["b1"])
                        + _nbytes(params["w2"]) + _nbytes(params["b2"])
                        + B * H * x.dtype.itemsize))


def _fused_forward(x, params, TM, *, single_buffer_weights):
    B, H = x.shape
    Hp = params["Hp"]
    resident = {}
    if single_buffer_weights and hasattr(pl, "Buffered"):
        # constant index_map => the weights are DMA'd once; no double buffer.
        resident = dict(pipeline_mode=pl.Buffered(1))
    return pl.pallas_call(
        mlp_fused_kernel,
        out_shape=jax.ShapeDtypeStruct((B, H), x.dtype),
        grid=(_cdiv(B, TM),),
        in_specs=[
            pl.BlockSpec((TM, H), lambda i: (i, 0)),            # stream x tiles
            pl.BlockSpec((H, Hp), lambda i: (0, 0), **resident),  # W1 resident
            pl.BlockSpec((1, Hp), lambda i: (0, 0), **resident),  # b1 resident
            pl.BlockSpec((Hp, H), lambda i: (0, 0), **resident),  # W2 resident
            pl.BlockSpec((1, H), lambda i: (0, 0), **resident),   # b2 resident
        ],
        out_specs=pl.BlockSpec((TM, H), lambda i: (i, 0)),
        compiler_params=pltpu.CompilerParams(
            dimension_semantics=("parallel",),                  # megacore / v7x
            vmem_limit_bytes=VMEM_LIMIT_BYTES),
        cost_estimate=_cost_estimate(B, H, Hp, x, params),
    )(x, params["w1"], params["b1"], params["w2"], params["b2"])


def _tiled_forward(x, params, TM, TH):
    B, H = x.shape
    Hp = params["Hp"]
    return pl.pallas_call(
        mlp_tiled_kernel,
        out_shape=jax.ShapeDtypeStruct((B, H), x.dtype),
        grid=(_cdiv(B, TM), Hp // TH),
        in_specs=[
            pl.BlockSpec((TM, H), lambda i, j: (i, 0)),   # resident across j
            pl.BlockSpec((H, TH), lambda i, j: (0, j)),   # W1 hidden tile
            pl.BlockSpec((1, TH), lambda i, j: (0, j)),   # b1 hidden tile
            pl.BlockSpec((TH, H), lambda i, j: (j, 0)),   # W2 hidden tile
            pl.BlockSpec((1, H), lambda i, j: (0, 0)),    # b2 resident
        ],
        out_specs=pl.BlockSpec((TM, H), lambda i, j: (i, 0)),
        scratch_shapes=[pltpu.VMEM((TM, H), jnp.float32)],
        compiler_params=pltpu.CompilerParams(
            dimension_semantics=("parallel", "arbitrary"),
            vmem_limit_bytes=VMEM_LIMIT_BYTES),
        cost_estimate=_cost_estimate(B, H, Hp, x, params),
    )(x, params["w1"], params["b1"], params["w2"], params["b2"])


def simple_model_forward(x, params, *, tm=256, hidden_tile=512, force_tiled=False):
    """x: (B, H) float32.  params: output of prepare_params (pre-padded)."""
    B, H = x.shape
    assert H == params["H"], "hidden size mismatch with prepared params"
    TM = _pick_tm(B, tm)

    # VMEM-budget check: keep weights fully resident when they fit, otherwise
    # fall back to the hidden-tiled accumulator path (v7x: 64 MiB budget,
    # v5e/v6e: 128 MiB, via the actual chip query).
    weight_bytes = sum(_nbytes(params[k]) for k in ("w1", "b1", "w2", "b2"))
    io_bytes = 2 * 2 * TM * H * x.dtype.itemsize       # double-buffered x/out
    use_tiled = force_tiled or (weight_bytes + io_bytes > _vmem_budget_bytes())

    if not use_tiled:
        try:
            return _fused_forward(x, params, TM, single_buffer_weights=True)
        except Exception:
            # pl.Buffered(1) not supported on this jax: default double buffering.
            return _fused_forward(x, params, TM, single_buffer_weights=False)

    TH = _pick_hidden_tile(params["Hp"], hidden_tile)
    return _tiled_forward(x, params, TM, TH)


# ----------------------------------------------------------------------------
# Self-test
# ----------------------------------------------------------------------------
if __name__ == "__main__":
    hidden = 32

    key = jax.random.PRNGKey(0)
    kx, kw1, kb1, kw2, kb2 = jax.random.split(key, 5)

    # Deterministic parameter init (uniform, roughly matching nn.Linear scale).
    bound = 1.0 / (hidden ** 0.5)
    w1 = jax.random.uniform(kw1, (hidden, hidden), jnp.float32, -bound, bound)
    b1 = jax.random.uniform(kb1, (hidden,), jnp.float32, -bound, bound)
    w2 = jax.random.uniform(kw2, (hidden, hidden), jnp.float32, -bound, bound)
    b2 = jax.random.uniform(kb2, (hidden,), jnp.float32, -bound, bound)

    def reference(x):
        hi = jnp.dot(x, w1, precision=jax.lax.Precision.HIGHEST) + b1
        hi = jnp.maximum(hi, 0.0)
        return jnp.dot(hi, w2, precision=jax.lax.Precision.HIGHEST) + b2

    # Pad / lay out parameters ONCE (init time), not per forward call.
    params_f32 = prepare_params(w1, b1, w2, b2)
    params_bf16 = prepare_params(w1, b1, w2, b2, matmul_dtype=jnp.bfloat16)

    # batch=8: spec's small shape (single tile).  batch=200: multi-tile grid
    # with a partial (masked) last batch block — no padding anywhere.
    for batch in (8, 200):
        x = jax.random.normal(jax.random.fold_in(kx, batch),
                              (batch, hidden), dtype=jnp.float32)
        ref = reference(x)

        # f32 weights-resident fused path.
        out = jax.block_until_ready(simple_model_forward(x, params_f32))
        assert out.shape == (batch, hidden)
        assert jnp.allclose(out, ref, atol=1e-4, rtol=1e-4)

        # bf16 MXU fast path (v6e/v7x); f32 accumulation + f32 elementwise.
        out_bf16 = jax.block_until_ready(simple_model_forward(x, params_bf16))
        assert jnp.allclose(out_bf16, ref, atol=2e-2, rtol=2e-2)

        # Hidden-tiled accumulator fallback (the large-H / small-VMEM path).
        out_tiled = jax.block_until_ready(
            simple_model_forward(x, params_f32, force_tiled=True))
        assert jnp.allclose(out_tiled, ref, atol=1e-4, rtol=1e-4)

    print("KERNEL_OK")
</pallas_src>

<mosaic_0001>
module attributes {stable_mosaic.version = 11 : i64} {
  func.func @mlp_fused_kernel(%arg0: i32, %arg1: memref<8x32xf32, #tpu.memory_space<vmem>>, %arg2: memref<32x128xf32, #tpu.memory_space<vmem>>, %arg3: memref<1x128xf32, #tpu.memory_space<vmem>>, %arg4: memref<128x32xf32, #tpu.memory_space<vmem>>, %arg5: memref<1x32xf32, #tpu.memory_space<vmem>>, %arg6: memref<8x32xf32, #tpu.memory_space<vmem>>) attributes {dimension_semantics = [#tpu.dimension_semantics<parallel>], iteration_bounds = array<i64: 1>, scalar_prefetch = 0 : i64, scratch_operands = 0 : i64, tpu.core_type = #tpu.core_type<tc>, window_params = [{transform_indices = @transform_0, window_bounds = array<i64: 8, 32>}, {pipeline_mode = #tpu.pipeline_mode<synchronous>, transform_indices = @transform_1, window_bounds = array<i64: 32, 128>}, {pipeline_mode = #tpu.pipeline_mode<synchronous>, transform_indices = @transform_2, window_bounds = array<i64: 1, 128>}, {pipeline_mode = #tpu.pipeline_mode<synchronous>, transform_indices = @transform_3, window_bounds = array<i64: 128, 32>}, {pipeline_mode = #tpu.pipeline_mode<synchronous>, transform_indices = @transform_4, window_bounds = array<i64: 1, 32>}, {transform_indices = @transform_5, window_bounds = array<i64: 8, 32>}]} {
    %c0 = arith.constant 0 : index
    %c0_0 = arith.constant 0 : index
    %0 = vector.load %arg1[%c0, %c0_0] : memref<8x32xf32, #tpu.memory_space<vmem>>, vector<8x32xf32>
    %c0_1 = arith.constant 0 : index
    %c0_2 = arith.constant 0 : index
    %1 = vector.load %arg2[%c0_1, %c0_2] : memref<32x128xf32, #tpu.memory_space<vmem>>, vector<32x128xf32>
    %cst = arith.constant dense<0.000000e+00> : vector<8x128xf32>
    %2 = tpu.matmul %0, %1, %cst {dimension_numbers = #tpu.dot_dimension_numbers<[1], [0], [0], [1], [0, 0, 1, 1], [], []>} : vector<8x32xf32>, vector<32x128xf32>, vector<8x128xf32> -> vector<8x128xf32>
    %c0_3 = arith.constant 0 : index
    %c0_4 = arith.constant 0 : index
    %3 = vector.load %arg3[%c0_3, %c0_4] : memref<1x128xf32, #tpu.memory_space<vmem>>, vector<1x128xf32>
    %4 = vector.broadcast %3 : vector<1x128xf32> to vector<8x128xf32>
    %5 = arith.addf %2, %4 : vector<8x128xf32>
    %cst_5 = arith.constant 0.000000e+00 : f32
    %6 = vector.broadcast %cst_5 : f32 to vector<8x128xf32>
    %7 = arith.maximumf %5, %6 : vector<8x128xf32>
    %c0_6 = arith.constant 0 : index
    %c0_7 = arith.constant 0 : index
    %8 = vector.load %arg4[%c0_6, %c0_7] : memref<128x32xf32, #tpu.memory_space<vmem>>, vector<128x32xf32>
    %cst_8 = arith.constant dense<0.000000e+00> : vector<8x32xf32>
    %9 = tpu.matmul %7, %8, %cst_8 {dimension_numbers = #tpu.dot_dimension_numbers<[1], [0], [0], [1], [0, 0, 1, 1], [], []>} : vector<8x128xf32>, vector<128x32xf32>, vector<8x32xf32> -> vector<8x32xf32>
    %c0_9 = arith.constant 0 : index
    %c0_10 = arith.constant 0 : index
    %10 = vector.load %arg5[%c0_9, %c0_10] : memref<1x32xf32, #tpu.memory_space<vmem>>, vector<1x32xf32>
    %11 = vector.broadcast %10 : vector<1x32xf32> to vector<8x32xf32>
    %12 = arith.addf %9, %11 : vector<8x32xf32>
    %c0_11 = arith.constant 0 : index
    %c0_12 = arith.constant 0 : index
    %13 = vector.load %arg6[%c0_11, %c0_12] : memref<8x32xf32, #tpu.memory_space<vmem>>, vector<8x32xf32>
    tpu.vector_store %arg6[%c0_11, %c0_12], %12 {strides = array<i32>} : memref<8x32xf32, #tpu.memory_space<vmem>>, vector<8x32xf32>,
    return
  }
  func.func @transform_0(%arg0: i32) -> (i32, i32) {
    %c0_i32 = arith.constant 0 : i32
    %c0_i32_0 = arith.constant 0 : i32
    return %arg0, %c0_i32 : i32, i32
  }
  func.func @transform_1(%arg0: i32) -> (i32, i32) {
    %c0_i32 = arith.constant 0 : i32
    %c0_i32_0 = arith.constant 0 : i32
    %c0_i32_1 = arith.constant 0 : i32
    return %c0_i32, %c0_i32_0 : i32, i32
  }
  func.func @transform_2(%arg0: i32) -> (i32, i32) {
    %c0_i32 = arith.constant 0 : i32
    %c0_i32_0 = arith.constant 0 : i32
    %c0_i32_1 = arith.constant 0 : i32
    return %c0_i32, %c0_i32_0 : i32, i32
  }
  func.func @transform_3(%arg0: i32) -> (i32, i32) {
    %c0_i32 = arith.constant 0 : i32
    %c0_i32_0 = arith.constant 0 : i32
    %c0_i32_1 = arith.constant 0 : i32
    return %c0_i32, %c0_i32_0 : i32, i32
  }
  func.func @transform_4(%arg0: i32) -> (i32, i32) {
    %c0_i32 = arith.constant 0 : i32
    %c0_i32_0 = arith.constant 0 : i32
    %c0_i32_1 = arith.constant 0 : i32
    return %c0_i32, %c0_i32_0 : i32, i32
  }
  func.func @transform_5(%arg0: i32) -> (i32, i32) {
    %c0_i32 = arith.constant 0 : i32
    %c0_i32_0 = arith.constant 0 : i32
    return %arg0, %c0_i32 : i32, i32
  }
}

module attributes {stable_mosaic.version = 11 : i64} {
  func.func @mlp_fused_kernel(%arg0: i32, %arg1: memref<8x32xf32, #tpu.memory_space<vmem>>, %arg2: memref<32x128xf32, #tpu.memory_space<vmem>>, %arg3: memref<1x128xf32, #tpu.memory_space<vmem>>, %arg4: memref<128x32xf32, #tpu.memory_space<vmem>>, %arg5: memref<1x32xf32, #tpu.memory_space<vmem>>, %arg6: memref<8x32xf32, #tpu.memory_space<vmem>>) attributes {dimension_semantics = [#tpu.dimension_semantics<parallel>], iteration_bounds = array<i64: 1>, scalar_prefetch = 0 : i64, scratch_operands = 0 : i64, tpu.core_type = #tpu.core_type<tc>, window_params = [{transform_indices = @transform_0, window_bounds = array<i64: 8, 32>}, {pipeline_mode = #tpu.pipeline_mode<synchronous>, transform_indices = @transform_1, window_bounds = array<i64: 32, 128>}, {pipeline_mode = #tpu.pipeline_mode<synchronous>, transform_indices = @transform_2, window_bounds = array<i64: 1, 128>}, {pipeline_mode = #tpu.pipeline_mode<synchronous>, transform_indices = @transform_3, window_bounds = array<i64: 128, 32>}, {pipeline_mode = #tpu.pipeline_mode<synchronous>, transform_indices = @transform_4, window_bounds = array<i64: 1, 32>}, {transform_indices = @transform_5, window_bounds = array<i64: 8, 32>}]} {
    %c0 = arith.constant 0 : index
    %c0_0 = arith.constant 0 : index
    %0 = vector.load %arg1[%c0, %c0_0] : memref<8x32xf32, #tpu.memory_space<vmem>>, vector<8x32xf32>
    %c0_1 = arith.constant 0 : index
    %c0_2 = arith.constant 0 : index
    %1 = vector.load %arg2[%c0_1, %c0_2] : memref<32x128xf32, #tpu.memory_space<vmem>>, vector<32x128xf32>
    %cst = arith.constant dense<0.000000e+00> : vector<8x128xf32>
    %2 = tpu.matmul %0, %1, %cst {dimension_numbers = #tpu.dot_dimension_numbers<[1], [0], [0], [1], [0, 0, 1, 1], [], []>} : vector<8x32xf32>, vector<32x128xf32>, vector<8x128xf32> -> vector<8x128xf32>
    %c0_3 = arith.constant 0 : index
    %c0_4 = arith.constant 0 : index
    %3 = vector.load %arg3[%c0_3, %c0_4] : memref<1x128xf32, #tpu.memory_space<vmem>>, vector<1x128xf32>
    %4 = vector.broadcast %3 : vector<1x128xf32> to vector<8x128xf32>
    %5 = arith.addf %2, %4 : vector<8x128xf32>
    %cst_5 = arith.constant 0.000000e+00 : f32
    %6 = vector.broadcast %cst_5 : f32 to vector<8x128xf32>
    %7 = arith.maximumf %5, %6 : vector<8x128xf32>
    %c0_6 = arith.constant 0 : index
    %c0_7 = arith.constant 0 : index
    %8 = vector.load %arg4[%c0_6, %c0_7] : memref<128x32xf32, #tpu.memory_space<vmem>>, vector<128x32xf32>
    %cst_8 = arith.constant dense<0.000000e+00> : vector<8x32xf32>
    %9 = tpu.matmul %7, %8, %cst_8 {dimension_numbers = #tpu.dot_dimension_numbers<[1], [0], [0], [1], [0, 0, 1, 1], [], []>} : vector<8x128xf32>, vector<128x32xf32>, vector<8x32xf32> -> vector<8x32xf32>
    %c0_9 = arith.constant 0 : index
    %c0_10 = arith.constant 0 : index
    %10 = vector.load %arg5[%c0_9, %c0_10] : memref<1x32xf32, #tpu.memory_space<vmem>>, vector<1x32xf32>
    %11 = vector.broadcast %10 : vector<1x32xf32> to vector<8x32xf32>
    %12 = arith.addf %9, %11 : vector<8x32xf32>
    %c0_11 = arith.constant 0 : index
    %c0_12 = arith.constant 0 : index
    %13 = vector.load %arg6[%c0_11, %c0_12] : memref<8x32xf32, #tpu.memory_space<vmem>>, vector<8x32xf32>
    tpu.vector_store %arg6[%c0_11, %c0_12], %12 {strides = array<i32>} : memref<8x32xf32, #tpu.memory_space<vmem>>, vector<8x32xf32>,
    return
  }
  func.func @transform_0(%arg0: i32) -> (i32, i32) {
    %c0_i32 = arith.constant 0 : i32
    %c0_i32_0 = arith.constant 0 : i32
    return %arg0, %c0_i32 : i32, i32
  }
  func.func @transform_1(%arg0: i32) -> (i32, i32) {
    %c0_i32 = arith.constant 0 : i32
    %c0_i32_0 = arith.constant 0 : i32
    %c0_i32_1 = arith.constant 0 : i32
    return %c0_i32, %c0_i32_0 : i32, i32
  }
  func.func @transform_2(%arg0: i32) -> (i32, i32) {
    %c0_i32 = arith.constant 0 : i32
    %c0_i32_0 = arith.constant 0 : i32
    %c0_i32_1 = arith.constant 0 : i32
    return %c0_i32, %c0_i32_0 : i32, i32
  }
  func.func @transform_3(%arg0: i32) -> (i32, i32) {
    %c0_i32 = arith.constant 0 : i32
    %c0_i32_0 = arith.constant 0 : i32
    %c0_i32_1 = arith.constant 0 : i32
    return %c0_i32, %c0_i32_0 : i32, i32
  }
  func.func @transform_4(%arg0: i32) -> (i32, i32) {
    %c0_i32 = arith.constant 0 : i32
    %c0_i32_0 = arith.constant 0 : i32
    %c0_i32_1 = arith.constant 0 : i32
    return %c0_i32, %c0_i32_0 : i32, i32
  }
  func.func @transform_5(%arg0: i32) -> (i32, i32) {
    %c0_i32 = arith.constant 0 : i32
    %c0_i32_0 = arith.constant 0 : i32
    return %arg0, %c0_i32 : i32, i32
  }
}

</mosaic_0001>

<llo_original>
// kernel: tpu_custom_call.1
$region0: #{tpu_custom_call.1}
  #allocation0 [shape = 'u32[]', space=smem, size = 0x4, offset = 0x4, fixed_abs, tag = 'smem constant byte address 0x4 - core index']
  #allocation1 [shape = 'u32[144,128]{1,0:T(1,128)}', space=vmem, size = 0x12000, scoped, tag = 'internal scratch']
  %s0 = inlined_call_operand.vmem [shape: f32[8,32], index: 0, kind: input, shape index: {}]
  %s1 = inlined_call_operand.vmem [shape: f32[32,128], index: 1, kind: input, shape index: {}]
  %s2 = inlined_call_operand.vmem [shape: f32[1,128], index: 2, kind: input, shape index: {}]
  %s3 = inlined_call_operand.vmem [shape: f32[128,32], index: 3, kind: input, shape index: {}]
  %s4 = inlined_call_operand.vmem [shape: f32[1,32], index: 4, kind: input, shape index: {}]
  %s5 = inlined_call_operand.hbm [shape: f32[8,32], index: 5, kind: output, shape index: {}]
  %s6 = sld [smem:[#allocation0]]
  $region30: #{tpu_custom_call.1} parent=0
    _
  %s8 = ssub.s32 1, %s6
  %s9 = scalar_select 0, %s8, %s6
  $region1: #{tpu_custom_call.1} parent=0
    #allocation2 [shape = 'u8[4096]{0}', space=vmem, size = 0x1000, scoped, tag = 'output window, operand 0, single buffered']
    #allocation3 [shape = 's32[1]{0}', space=sflag, size = 0x4, scoped, tag = 'scoped memory for tpu_custom_call.1']
    %10 = vsyncpa [#allocation3], 0
    // Predicated region
    $region2: #{tpu_custom_call.1} parent=1 // pred_check
      _
    $region3: #{tpu_custom_call.1} parent=1 // pred_check_branch
      %12 = sbr.rel (0) target = $region5
    $region4: #{tpu_custom_call.1} parent=1 // pred_region
      _
    $region5: #{tpu_custom_call.1} parent=1 // pred_fallthru
      _
    // Predicated region
    $region6: #{tpu_custom_call.1} parent=1 // pred_check
      _
    $region7: #{tpu_custom_call.1} parent=1 // pred_check_branch
      %14 = sbr.rel (0) target = $region9
    $region8: #{tpu_custom_call.1} parent=1 // pred_region
      _
    $region9: #{tpu_custom_call.1} parent=1 // pred_fallthru
      _
    // Predicated region
    $region10: #{tpu_custom_call.1} parent=1 // pred_check
      _
    $region11: #{tpu_custom_call.1} parent=1 // pred_check_branch
      %16 = sbr.rel (0) target = $region13
    $region12: #{tpu_custom_call.1} parent=1 // pred_region
      _
    $region13: #{tpu_custom_call.1} parent=1 // pred_fallthru
      _
    // Predicated region
    $region14: #{tpu_custom_call.1} parent=1 // pred_check
      _
    $region15: #{tpu_custom_call.1} parent=1 // pred_check_branch
      %18 = sbr.rel (0) target = $region17
    $region16: #{tpu_custom_call.1} parent=1 // pred_region
      _
    $region17: #{tpu_custom_call.1} parent=1 // pred_fallthru
      _
    // Predicated region
    $region18: #{tpu_custom_call.1} parent=1 // pred_check
      _
    $region19: #{tpu_custom_call.1} parent=1 // pred_check_branch
      %20 = sbr.rel (0) target = $region21
    $region20: #{tpu_custom_call.1} parent=1 // pred_region
      _
    $region21: #{tpu_custom_call.1} parent=1 // pred_fallthru
      _
    %v21 = vld [vmem:[%s0] sm:$0xff]
    %v22 = vld [vmem:[%s1] sm:$0xff]
    %v23 = vld [vmem:[%s1 + $0x8] sm:$0xff]
    %v24 = vld [vmem:[%s1 + $0x10] sm:$0xff]
    %v25 = vld [vmem:[%s1 + $0x18] sm:$0xff]
    %v26 = vld [vmem:[%s2] sm:$0x1]
    %v28 = vlaneseq
    %v29 = vshrl.u32 %v28, 7
    %v30 = vsub.s32 0, %v29
    %v31 = vrot.slane %v26, %v30
    %vm33 = vcmask 261120
    %v35 = vsel %vm33, %v21, 0
    %37 = vmatprep.subr.mxu0 0.0
    %38 = vmatpush1.msra.mxu0 %v22
    %39 = vmatprep.subr.mxu0 0.0
    %40 = vmatpush1.msra.mxu0 %v23
    %41 = vmatprep.subr.mxu0 0.0
    %42 = vmatpush1.msra.mxu0 %v24
    %43 = vmatprep.subr.mxu0 0.0
    %44 = vmatpush1.msra.mxu0 %v25
    %45 = vmatprep.subr.mxu0 0.0
    %46 = vmatpush1.msra.mxu0 0.0
    %47 = vmatprep.subr.mxu0 0.0
    %48 = vmatpush1.msra.mxu0 0.0
    %49 = vmatprep.subr.mxu0 0.0
    %50 = vmatpush1.msra.mxu0 0.0
    %51 = vmatprep.subr.mxu0 0.0
    %52 = vmatpush1.msra.mxu0 0.0
    %53 = vmatprep.subr.mxu0 0.0
    %54 = vmatpush1.msra.mxu0 0.0
    %55 = vmatprep.subr.mxu0 0.0
    %56 = vmatpush1.msra.mxu0 0.0
    %57 = vmatprep.subr.mxu0 0.0
    %58 = vmatpush1.msra.mxu0 0.0
    %59 = vmatprep.subr.mxu0 0.0
    %60 = vmatpush1.msra.mxu0 0.0
    %61 = vmatprep.subr.mxu0 0.0
    %62 = vmatpush1.msra.mxu0 0.0
    %63 = vmatprep.subr.mxu0 0.0
    %64 = vmatpush1.msra.mxu0 0.0
    %65 = vmatprep.subr.mxu0 0.0
    %66 = vmatpush1.msra.mxu0 0.0
    %67 = vmatprep.subr.mxu0 0.0
    %68 = vmatpush1.msra.mxu0 0.0
    %69 = vmatprep.subr.mxu0 0.0
    %70 = vmatpush1.msra.mxu0 0.0
    %71 = vmatprep.subr.mxu0 0.0
    %72 = vmatpush1.msra.mxu0 0.0
    %73 = vmatprep.subr.mxu0 0.0
    %74 = vmatpush1.msra.mxu0 0.0
    %75 = vmatprep.subr.mxu0 0.0
    %76 = vmatpush1.msra.mxu0 0.0
    %77 = vmatprep.subr.mxu0 0.0
    %78 = vmatpush1.msra.mxu0 0.0
    %79 = vmatprep.subr.mxu0 0.0
    %80 = vmatpush1.msra.mxu0 0.0
    %81 = vmatprep.subr.mxu0 0.0
    %82 = vmatpush1.msra.mxu0 0.0
    %83 = vmatprep.subr.mxu0 0.0
    %84 = vmatpush1.msra.mxu0 0.0
    %85 = vmatprep.subr.mxu0 0.0
    %86 = vmatpush1.msra.mxu0 0.0
    %87 = vmatprep.subr.mxu0 0.0
    %88 = vmatpush1.msra.mxu0 0.0
    %89 = vmatprep.subr.mxu0 0.0
    %90 = vmatpush1.msra.mxu0 0.0
    %91 = vmatprep.subr.mxu0 0.0
    %92 = vmatpush1.msra.mxu0 0.0
    %93 = vmatprep.subr.mxu0 0.0
    %94 = vmatpush1.msra.mxu0 0.0
    %95 = vmatprep.subr.mxu0 0.0
    %96 = vmatpush1.msra.mxu0 0.0
    %97 = vmatprep.subr.mxu0 0.0
    %98 = vmatpush1.msra.mxu0 0.0
    %99 = vmatprep.subr.mxu0 0.0
    %100 = vmatpush1.msra.mxu0 0.0
    %101 = vmatprep.mubr.f32.mxu0 0.0
    %102 = vmatmul.mubr.f32.gmra.mrb[0].mxu0 %v35
    %v103 = vpop.f32.mrb[0].mxu0
    %v104 = vadd.f32 %v31, %v103
    %v105 = vpop.f32.mrb[0].mxu0
    %106 = vdwg.mxu0
    %v107 = vmax.f32 %v104, 0.0
    %v108 = vld [vmem:[%s3] sm:$0xff]
    %v109 = vld [vmem:[%s3 + $0x8] sm:$0xff]
    %v110 = vld [vmem:[%s3 + $0x10] sm:$0xff]
    %v111 = vld [vmem:[%s3 + $0x18] sm:$0xff]
    %v112 = vld [vmem:[%s3 + $0x20] sm:$0xff]
    %v113 = vld [vmem:[%s3 + $0x28] sm:$0xff]
    %v114 = vld [vmem:[%s3 + $0x30] sm:$0xff]
    %v115 = vld [vmem:[%s3 + $0x38] sm:$0xff]
    %v116 = vld [vmem:[%s3 + $0x40] sm:$0xff]
    %v117 = vld [vmem:[%s3 + $0x48] sm:$0xff]
    %v118 = vld [vmem:[%s3 + $0x50] sm:$0xff]
    %v119 = vld [vmem:[%s3 + $0x58] sm:$0xff]
    %v120 = vld [vmem:[%s3 + $0x60] sm:$0xff]
    %v121 = vld [vmem:[%s3 + $0x68] sm:$0xff]
    %v122 = vld [vmem:[%s3 + $0x70] sm:$0xff]
    %v123 = vld [vmem:[%s3 + $0x78] sm:$0xff]
    %v124 = vld [vmem:[%s4] sm:$0x1]
    %v126 = vlaneseq
    %v127 = vshrl.u32 %v126, 7
    %v128 = vsub.s32 0, %v127
    %v129 = vrot.slane %v124, %v128
    %131 = vmatprep.subr.mxu0 0.0
    %132 = vmatpush1.msra.mxu0 %v108
    %133 = vmatprep.subr.mxu0 0.0
    %134 = vmatpush1.msra.mxu0 %v109
    %135 = vmatprep.subr.mxu0 0.0
    %136 = vmatpush1.msra.mxu0 %v110
    %137 = vmatprep.subr.mxu0 0.0
    %138 = vmatpush1.msra.mxu0 %v111
    %139 = vmatprep.subr.mxu0 0.0
    %140 = vmatpush1.msra.mxu0 %v112
    %141 = vmatprep.subr.mxu0 0.0
    %142 = vmatpush1.msra.mxu0 %v113
    %143 = vmatprep.subr.mxu0 0.0
    %144 = vmatpush1.msra.mxu0 %v114
    %145 = vmatprep.subr.mxu0 0.0
    %146 = vmatpush1.msra.mxu0 %v115
    %147 = vmatprep.subr.mxu0 0.0
    %148 = vmatpush1.msra.mxu0 %v116
    %149 = vmatprep.subr.mxu0 0.0
    %150 = vmatpush1.msra.mxu0 %v117
    %151 = vmatprep.subr.mxu0 0.0
    %152 = vmatpush1.msra.mxu0 %v118
    %153 = vmatprep.subr.mxu0 0.0
    %154 = vmatpush1.msra.mxu0 %v119
    %155 = vmatprep.subr.mxu0 0.0
    %156 = vmatpush1.msra.mxu0 %v120
    %157 = vmatprep.subr.mxu0 0.0
    %158 = vmatpush1.msra.mxu0 %v121
    %159 = vmatprep.subr.mxu0 0.0
    %160 = vmatpush1.msra.mxu0 %v122
    %161 = vmatprep.subr.mxu0 0.0
    %162 = vmatpush1.msra.mxu0 %v123
    %163 = vmatprep.subr.mxu0 0.0
    %164 = vmatpush1.msra.mxu0 0.0
    %165 = vmatprep.subr.mxu0 0.0
    %166 = vmatpush1.msra.mxu0 0.0
    %167 = vmatprep.subr.mxu0 0.0
    %168 = vmatpush1.msra.mxu0 0.0
    %169 = vmatprep.subr.mxu0 0.0
    %170 = vmatpush1.msra.mxu0 0.0
    %171 = vmatprep.subr.mxu0 0.0
    %172 = vmatpush1.msra.mxu0 0.0
    %173 = vmatprep.subr.mxu0 0.0
    %174 = vmatpush1.msra.mxu0 0.0
    %175 = vmatprep.subr.mxu0 0.0
    %176 = vmatpush1.msra.mxu0 0.0
    %177 = vmatprep.subr.mxu0 0.0
    %178 = vmatpush1.msra.mxu0 0.0
    %179 = vmatprep.subr.mxu0 0.0
    %180 = vmatpush1.msra.mxu0 0.0
    %181 = vmatprep.subr.mxu0 0.0
    %182 = vmatpush1.msra.mxu0 0.0
    %183 = vmatprep.subr.mxu0 0.0
    %184 = vmatpush1.msra.mxu0 0.0
    %185 = vmatprep.subr.mxu0 0.0
    %186 = vmatpush1.msra.mxu0 0.0
    %187 = vmatprep.subr.mxu0 0.0
    %188 = vmatpush1.msra.mxu0 0.0
    %189 = vmatprep.subr.mxu0 0.0
    %190 = vmatpush1.msra.mxu0 0.0
    %191 = vmatprep.subr.mxu0 0.0
    %192 = vmatpush1.msra.mxu0 0.0
    %193 = vmatprep.subr.mxu0 0.0
    %194 = vmatpush1.msra.mxu0 0.0
    %195 = vmatprep.mubr.f32.mxu0 0.0
    %196 = vmatmul.mubr.f32.gmra.mrb[0].mxu0 %v107
    %v197 = vpop.f32.mrb[0].mxu0
    %v198 = vadd.f32 %v129, %v197
    %v199 = vpop.f32.mrb[0].mxu0
    %200 = vdwg.mxu0
    %201 = vst.msk [vmem:[#allocation2] sm:$0xff] %vm33, %v198
    // Predicated region
    $region22: #{tpu_custom_call.1} parent=1 // pred_check
      _
    $region23: #{tpu_custom_call.1} parent=1 // pred_check_branch
      %203 = sbr.rel (0) target = $region25
    $region24: #{tpu_custom_call.1} parent=1 // pred_region
      %s205 = ssub.s32 128, 128
      %206 = vsyncadd [#allocation3], %s205
      %s208 = sshll.u32 [#allocation2], 4
      %s209 = int_to_ptr.vmem [resolvable:$true] %s208
      %211 = dma.vmem_to_hbm [thread:$0]  %s209, 128, %s5, [#allocation3]
    $region25: #{tpu_custom_call.1} parent=1 // pred_fallthru
      _
    // Predicated region
    $region26: #{tpu_custom_call.1} parent=1 // pred_check
      _
    $region27: #{tpu_custom_call.1} parent=1 // pred_check_branch
      %213 = sbr.rel (0) target = $region29
    $region28: #{tpu_custom_call.1} parent=1 // pred_region
      %214 = dma.done [#allocation3], 128
    $region29: #{tpu_custom_call.1} parent=1 // pred_fallthru
      _
    %215 = vsyncpa [#allocation3], 1

// kernel: tpu_custom_call.1
$region0: #{tpu_custom_call.1}
  #allocation0 [shape = 'u32[]', space=smem, size = 0x4, offset = 0x4, fixed_abs, tag = 'smem constant byte address 0x4 - core index']
  #allocation1 [shape = 'u32[144,128]{1,0:T(1,128)}', space=vmem, size = 0x12000, scoped, tag = 'internal scratch']
  %s0 = inlined_call_operand.vmem [shape: f32[8,32], index: 0, kind: input, shape index: {}]
  %s1 = inlined_call_operand.vmem [shape: f32[32,128], index: 1, kind: input, shape index: {}]
  %s2 = inlined_call_operand.vmem [shape: f32[1,128], index: 2, kind: input, shape index: {}]
  %s3 = inlined_call_operand.vmem [shape: f32[128,32], index: 3, kind: input, shape index: {}]
  %s4 = inlined_call_operand.vmem [shape: f32[1,32], index: 4, kind: input, shape index: {}]
  %s5 = inlined_call_operand.hbm [shape: f32[8,32], index: 5, kind: output, shape index: {}]
  %s6 = sld [smem:[#allocation0]]
  $region30: #{tpu_custom_call.1} parent=0
    _
  %s8 = ssub.s32 1, %s6
  %s9 = scalar_select 0, %s8, %s6
  $region1: #{tpu_custom_call.1} parent=0
    #allocation2 [shape = 'u8[4096]{0}', space=vmem, size = 0x1000, scoped, tag = 'output window, operand 0, single buffered']
    #allocation3 [shape = 's32[1]{0}', space=sflag, size = 0x4, scoped, tag = 'scoped memory for tpu_custom_call.1']
    %10 = vsyncpa [#allocation3], 0
    // Predicated region
    $region2: #{tpu_custom_call.1} parent=1 // pred_check
      _
    $region3: #{tpu_custom_call.1} parent=1 // pred_check_branch
      %12 = sbr.rel (0) target = $region5
    $region4: #{tpu_custom_call.1} parent=1 // pred_region
      _
    $region5: #{tpu_custom_call.1} parent=1 // pred_fallthru
      _
    // Predicated region
    $region6: #{tpu_custom_call.1} parent=1 // pred_check
      _
    $region7: #{tpu_custom_call.1} parent=1 // pred_check_branch
      %14 = sbr.rel (0) target = $region9
    $region8: #{tpu_custom_call.1} parent=1 // pred_region
      _
    $region9: #{tpu_custom_call.1} parent=1 // pred_fallthru
      _
    // Predicated region
    $region10: #{tpu_custom_call.1} parent=1 // pred_check
      _
    $region11: #{tpu_custom_call.1} parent=1 // pred_check_branch
      %16 = sbr.rel (0) target = $region13
    $region12: #{tpu_custom_call.1} parent=1 // pred_region
      _
    $region13: #{tpu_custom_call.1} parent=1 // pred_fallthru
      _
    // Predicated region
    $region14: #{tpu_custom_call.1} parent=1 // pred_check
      _
    $region15: #{tpu_custom_call.1} parent=1 // pred_check_branch
      %18 = sbr.rel (0) target = $region17
    $region16: #{tpu_custom_call.1} parent=1 // pred_region
      _
    $region17: #{tpu_custom_call.1} parent=1 // pred_fallthru
      _
    // Predicated region
    $region18: #{tpu_custom_call.1} parent=1 // pred_check
      _
    $region19: #{tpu_custom_call.1} parent=1 // pred_check_branch
      %20 = sbr.rel (0) target = $region21
    $region20: #{tpu_custom_call.1} parent=1 // pred_region
      _
    $region21: #{tpu_custom_call.1} parent=1 // pred_fallthru
      _
    %v21 = vld [vmem:[%s0] sm:$0xff]
    %v22 = vld [vmem:[%s1] sm:$0xff]
    %v23 = vld [vmem:[%s1 + $0x8] sm:$0xff]
    %v24 = vld [vmem:[%s1 + $0x10] sm:$0xff]
    %v25 = vld [vmem:[%s1 + $0x18] sm:$0xff]
    %v26 = vld [vmem:[%s2] sm:$0x1]
    %v28 = vlaneseq
    %v29 = vshrl.u32 %v28, 7
    %v30 = vsub.s32 0, %v29
    %v31 = vrot.slane %v26, %v30
    %vm33 = vcmask 261120
    %v35 = vsel %vm33, %v21, 0
    %37 = vmatprep.subr.mxu0 0.0
    %38 = vmatpush1.msra.mxu0 %v22
    %39 = vmatprep.subr.mxu0 0.0
    %40 = vmatpush1.msra.mxu0 %v23
    %41 = vmatprep.subr.mxu0 0.0
    %42 = vmatpush1.msra.mxu0 %v24
    %43 = vmatprep.subr.mxu0 0.0
    %44 = vmatpush1.msra.mxu0 %v25
    %45 = vmatprep.subr.mxu0 0.0
    %46 = vmatpush1.msra.mxu0 0.0
    %47 = vmatprep.subr.mxu0 0.0
    %48 = vmatpush1.msra.mxu0 0.0
    %49 = vmatprep.subr.mxu0 0.0
    %50 = vmatpush1.msra.mxu0 0.0
    %51 = vmatprep.subr.mxu0 0.0
    %52 = vmatpush1.msra.mxu0 0.0
    %53 = vmatprep.subr.mxu0 0.0
    %54 = vmatpush1.msra.mxu0 0.0
    %55 = vmatprep.subr.mxu0 0.0
    %56 = vmatpush1.msra.mxu0 0.0
    %57 = vmatprep.subr.mxu0 0.0
    %58 = vmatpush1.msra.mxu0 0.0
    %59 = vmatprep.subr.mxu0 0.0
    %60 = vmatpush1.msra.mxu0 0.0
    %61 = vmatprep.subr.mxu0 0.0
    %62 = vmatpush1.msra.mxu0 0.0
    %63 = vmatprep.subr.mxu0 0.0
    %64 = vmatpush1.msra.mxu0 0.0
    %65 = vmatprep.subr.mxu0 0.0
    %66 = vmatpush1.msra.mxu0 0.0
    %67 = vmatprep.subr.mxu0 0.0
    %68 = vmatpush1.msra.mxu0 0.0
    %69 = vmatprep.subr.mxu0 0.0
    %70 = vmatpush1.msra.mxu0 0.0
    %71 = vmatprep.subr.mxu0 0.0
    %72 = vmatpush1.msra.mxu0 0.0
    %73 = vmatprep.subr.mxu0 0.0
    %74 = vmatpush1.msra.mxu0 0.0
    %75 = vmatprep.subr.mxu0 0.0
    %76 = vmatpush1.msra.mxu0 0.0
    %77 = vmatprep.subr.mxu0 0.0
    %78 = vmatpush1.msra.mxu0 0.0
    %79 = vmatprep.subr.mxu0 0.0
    %80 = vmatpush1.msra.mxu0 0.0
    %81 = vmatprep.subr.mxu0 0.0
    %82 = vmatpush1.msra.mxu0 0.0
    %83 = vmatprep.subr.mxu0 0.0
    %84 = vmatpush1.msra.mxu0 0.0
    %85 = vmatprep.subr.mxu0 0.0
    %86 = vmatpush1.msra.mxu0 0.0
    %87 = vmatprep.subr.mxu0 0.0
    %88 = vmatpush1.msra.mxu0 0.0
    %89 = vmatprep.subr.mxu0 0.0
    %90 = vmatpush1.msra.mxu0 0.0
    %91 = vmatprep.subr.mxu0 0.0
    %92 = vmatpush1.msra.mxu0 0.0
    %93 = vmatprep.subr.mxu0 0.0
    %94 = vmatpush1.msra.mxu0 0.0
    %95 = vmatprep.subr.mxu0 0.0
    %96 = vmatpush1.msra.mxu0 0.0
    %97 = vmatprep.subr.mxu0 0.0
    %98 = vmatpush1.msra.mxu0 0.0
    %99 = vmatprep.subr.mxu0 0.0
    %100 = vmatpush1.msra.mxu0 0.0
    %101 = vmatprep.mubr.f32.mxu0 0.0
    %102 = vmatmul.mubr.f32.gmra.mrb[0].mxu0 %v35
    %v103 = vpop.f32.mrb[0].mxu0
    %v104 = vadd.f32 %v31, %v103
    %v105 = vpop.f32.mrb[0].mxu0
    %106 = vdwg.mxu0
    %v107 = vmax.f32 %v104, 0.0
    %v108 = vld [vmem:[%s3] sm:$0xff]
    %v109 = vld [vmem:[%s3 + $0x8] sm:$0xff]
    %v110 = vld [vmem:[%s3 + $0x10] sm:$0xff]
    %v111 = vld [vmem:[%s3 + $0x18] sm:$0xff]
    %v112 = vld [vmem:[%s3 + $0x20] sm:$0xff]
    %v113 = vld [vmem:[%s3 + $0x28] sm:$0xff]
    %v114 = vld [vmem:[%s3 + $0x30] sm:$0xff]
    %v115 = vld [vmem:[%s3 + $0x38] sm:$0xff]
    %v116 = vld [vmem:[%s3 + $0x40] sm:$0xff]
    %v117 = vld [vmem:[%s3 + $0x48] sm:$0xff]
    %v118 = vld [vmem:[%s3 + $0x50] sm:$0xff]
    %v119 = vld [vmem:[%s3 + $0x58] sm:$0xff]
    %v120 = vld [vmem:[%s3 + $0x60] sm:$0xff]
    %v121 = vld [vmem:[%s3 + $0x68] sm:$0xff]
    %v122 = vld [vmem:[%s3 + $0x70] sm:$0xff]
    %v123 = vld [vmem:[%s3 + $0x78] sm:$0xff]
    %v124 = vld [vmem:[%s4] sm:$0x1]
    %v126 = vlaneseq
    %v127 = vshrl.u32 %v126, 7
    %v128 = vsub.s32 0, %v127
    %v129 = vrot.slane %v124, %v128
    %131 = vmatprep.subr.mxu0 0.0
    %132 = vmatpush1.msra.mxu0 %v108
    %133 = vmatprep.subr.mxu0 0.0
    %134 = vmatpush1.msra.mxu0 %v109
    %135 = vmatprep.subr.mxu0 0.0
    %136 = vmatpush1.msra.mxu0 %v110
    %137 = vmatprep.subr.mxu0 0.0
    %138 = vmatpush1.msra.mxu0 %v111
    %139 = vmatprep.subr.mxu0 0.0
    %140 = vmatpush1.msra.mxu0 %v112
    %141 = vmatprep.subr.mxu0 0.0
    %142 = vmatpush1.msra.mxu0 %v113
    %143 = vmatprep.subr.mxu0 0.0
    %144 = vmatpush1.msra.mxu0 %v114
    %145 = vmatprep.subr.mxu0 0.0
    %146 = vmatpush1.msra.mxu0 %v115
    %147 = vmatprep.subr.mxu0 0.0
    %148 = vmatpush1.msra.mxu0 %v116
    %149 = vmatprep.subr.mxu0 0.0
    %150 = vmatpush1.msra.mxu0 %v117
    %151 = vmatprep.subr.mxu0 0.0
    %152 = vmatpush1.msra.mxu0 %v118
    %153 = vmatprep.subr.mxu0 0.0
    %154 = vmatpush1.msra.mxu0 %v119
    %155 = vmatprep.subr.mxu0 0.0
    %156 = vmatpush1.msra.mxu0 %v120
    %157 = vmatprep.subr.mxu0 0.0
    %158 = vmatpush1.msra.mxu0 %v121
    %159 = vmatprep.subr.mxu0 0.0
    %160 = vmatpush1.msra.mxu0 %v122
    %161 = vmatprep.subr.mxu0 0.0
    %162 = vmatpush1.msra.mxu0 %v123
    %163 = vmatprep.subr.mxu0 0.0
    %164 = vmatpush1.msra.mxu0 0.0
    %165 = vmatprep.subr.mxu0 0.0
    %166 = vmatpush1.msra.mxu0 0.0
    %167 = vmatprep.subr.mxu0 0.0
    %168 = vmatpush1.msra.mxu0 0.0
    %169 = vmatprep.subr.mxu0 0.0
    %170 = vmatpush1.msra.mxu0 0.0
    %171 = vmatprep.subr.mxu0 0.0
    %172 = vmatpush1.msra.mxu0 0.0
    %173 = vmatprep.subr.mxu0 0.0
    %174 = vmatpush1.msra.mxu0 0.0
    %175 = vmatprep.subr.mxu0 0.0
    %176 = vmatpush1.msra.mxu0 0.0
    %177 = vmatprep.subr.mxu0 0.0
    %178 = vmatpush1.msra.mxu0 0.0
    %179 = vmatprep.subr.mxu0 0.0
    %180 = vmatpush1.msra.mxu0 0.0
    %181 = vmatprep.subr.mxu0 0.0
    %182 = vmatpush1.msra.mxu0 0.0
    %183 = vmatprep.subr.mxu0 0.0
    %184 = vmatpush1.msra.mxu0 0.0
    %185 = vmatprep.subr.mxu0 0.0
    %186 = vmatpush1.msra.mxu0 0.0
    %187 = vmatprep.subr.mxu0 0.0
    %188 = vmatpush1.msra.mxu0 0.0
    %189 = vmatprep.subr.mxu0 0.0
    %190 = vmatpush1.msra.mxu0 0.0
    %191 = vmatprep.subr.mxu0 0.0
    %192 = vmatpush1.msra.mxu0 0.0
    %193 = vmatprep.subr.mxu0 0.0
    %194 = vmatpush1.msra.mxu0 0.0
    %195 = vmatprep.mubr.f32.mxu0 0.0
    %196 = vmatmul.mubr.f32.gmra.mrb[0].mxu0 %v107
    %v197 = vpop.f32.mrb[0].mxu0
    %v198 = vadd.f32 %v129, %v197
    %v199 = vpop.f32.mrb[0].mxu0
    %200 = vdwg.mxu0
    %201 = vst.msk [vmem:[#allocation2] sm:$0xff] %vm33, %v198
    // Predicated region
    $region22: #{tpu_custom_call.1} parent=1 // pred_check
      _
    $region23: #{tpu_custom_call.1} parent=1 // pred_check_branch
      %203 = sbr.rel (0) target = $region25
    $region24: #{tpu_custom_call.1} parent=1 // pred_region
      %s205 = ssub.s32 128, 128
      %206 = vsyncadd [#allocation3], %s205
      %s208 = sshll.u32 [#allocation2], 4
      %s209 = int_to_ptr.vmem [resolvable:$true] %s208
      %211 = dma.vmem_to_hbm [thread:$0]  %s209, 128, %s5, [#allocation3]
    $region25: #{tpu_custom_call.1} parent=1 // pred_fallthru
      _
    // Predicated region
    $region26: #{tpu_custom_call.1} parent=1 // pred_check
      _
    $region27: #{tpu_custom_call.1} parent=1 // pred_check_branch
      %213 = sbr.rel (0) target = $region29
    $region28: #{tpu_custom_call.1} parent=1 // pred_region
      %214 = dma.done [#allocation3], 128
    $region29: #{tpu_custom_call.1} parent=1 // pred_fallthru
      _
    %215 = vsyncpa [#allocation3], 1

</llo_original>
